<compile_context>
chip_gen: v6e
topology: v6e:2x2x1
jax: 0.10.0
libtpu: 0.0.40
codegen_flags: <defaults>
</compile_context>

<pallas_src>
import jax
import jax.numpy as jnp
from jax.experimental import pallas as pl
from jax.experimental.pallas import tpu as pltpu

BN_EPS = 1e-5


def _round_up(n: int, m: int) -> int:
    return ((n + m - 1) // m) * m


# --------------------------------------------------------------------------
# Kernel: one batch tile [TM, in_size] -> [TM, out_size], all weights resident.
# --------------------------------------------------------------------------
def _mlp_kernel(
    x_ref,
    w1_ref, b1_ref,
    w2_ref, b2_ref,
    w3_ref, b3_ref,
    w4_ref, b4_ref,
    w5_ref, b5_ref,
    o_ref,
):
    def layer(h, w_ref, b_ref, relu):
        # bf16 operands on the MXU, f32 accumulation, f32 bias-add / ReLU.
        acc = jnp.dot(h.astype(jnp.bfloat16), w_ref[...],
                      preferred_element_type=jnp.float32) + b_ref[...]
        return jnp.maximum(acc, 0.0) if relu else acc

    h = layer(x_ref[...], w1_ref, b1_ref, relu=True)
    h = layer(h, w2_ref, b2_ref, relu=True)
    h = layer(h, w3_ref, b3_ref, relu=True)
    h = layer(h, w4_ref, b4_ref, relu=True)
    out = layer(h, w5_ref, b5_ref, relu=False)
    o_ref[...] = out.astype(o_ref.dtype)


# --------------------------------------------------------------------------
# One-time parameter preparation (hoisted out of the hot path):
# fold eval-mode BN into the transposed weights, cast weights to bf16.
# Shifts / final bias stay f32 (added post-accumulation).
# --------------------------------------------------------------------------
def prepare_params(params):
    def bn_fold(g, be, m, v):
        scale = g / jnp.sqrt(v + BN_EPS)
        shift = be - m * scale
        return scale, shift

    s1, sh1 = bn_fold(params["g1"], params["be1"], params["m1"], params["v1"])
    s2, sh2 = bn_fold(params["g2"], params["be2"], params["m2"], params["v2"])
    s3, sh3 = bn_fold(params["g3"], params["be3"], params["m3"], params["v3"])
    s4, sh4 = bn_fold(params["g4"], params["be4"], params["m4"], params["v4"])

    def wT(w, scale=None):
        wt = w.T if scale is None else w.T * scale
        return wt.astype(jnp.bfloat16)

    def row(b):
        return b.reshape(1, -1).astype(jnp.float32)

    # x @ (W.T * scale) + shift  ==  BN(x @ W.T)   (eval-mode BN)
    return {
        "w1": wT(params["w1"], s1), "b1": row(sh1),            # [in, 256], [1, 256]
        "w2": wT(params["w2"], s2), "b2": row(sh2),            # [256,128], [1, 128]
        "w3": wT(params["w3"], s3), "b3": row(sh3),            # [128, 64], [1,  64]
        "w4": wT(params["w4"], s4), "b4": row(sh4),            # [ 64, 32], [1,  32]
        "w5": wT(params["w5"]),     "b5": row(params["b5"]),   # [ 32,out], [1, out]
    }


# --------------------------------------------------------------------------
# Jitted forward: batch-tiled pallas_call, no wrapper pad/slice passes.
# --------------------------------------------------------------------------
@jax.jit
def regression_net_forward(x, prepared):
    B, in_size = x.shape
    out_size = prepared["w5"].shape[1]

    # Batch tile: multiple of 8 (f32 sublane), up to 1024 rows per grid step.
    # When B allows it, use >= 2 grid steps so the "parallel" batch axis spans
    # both TensorCores on v7x (no-op on single-TC v5e/v6e).
    TM_MAX = 1024
    if B <= 8:
        TM = 8
    elif B <= 2 * TM_MAX:
        TM = _round_up((B + 1) // 2, 8)
    else:
        TM = TM_MAX
    grid = (pl.cdiv(B, TM),)

    weight_keys = ("w1", "b1", "w2", "b2", "w3", "b3", "w4", "b4", "w5", "b5")
    weight_args = tuple(prepared[k] for k in weight_keys)
    # Constant index_map -> weights are DMA'd once and stay resident in VMEM.
    weight_specs = [pl.BlockSpec(a.shape, lambda i: (0, 0)) for a in weight_args]

    flops = 2 * B * (in_size * 256 + 256 * 128 + 128 * 64 + 64 * 32
                     + 32 * out_size)
    bytes_accessed = (int(x.size) * x.dtype.itemsize
                      + 4 * B * out_size
                      + sum(int(a.size) * a.dtype.itemsize for a in weight_args))

    return pl.pallas_call(
        _mlp_kernel,
        out_shape=jax.ShapeDtypeStruct((B, out_size), jnp.float32),
        grid=grid,
        in_specs=[pl.BlockSpec((TM, in_size), lambda i: (i, 0))] + weight_specs,
        out_specs=pl.BlockSpec((TM, out_size), lambda i: (i, 0)),
        compiler_params=pltpu.CompilerParams(
            dimension_semantics=("parallel",)),
        cost_estimate=pl.CostEstimate(
            flops=flops, transcendentals=0, bytes_accessed=bytes_accessed),
    )(x, *weight_args)


# --------------------------------------------------------------------------
# Deterministic parameter init (mirrors the PyTorch module's shapes).
# --------------------------------------------------------------------------
def init_params(key, input_size, output_size):
    k_lin = jax.random.split(key, 6)

    def lin(k, out_f, in_f):
        bound = 1.0 / jnp.sqrt(in_f)
        return jax.random.uniform(k, (out_f, in_f), jnp.float32, -bound, bound)

    params = {
        "w1": lin(k_lin[0], 256, input_size),
        "w2": lin(k_lin[1], 128, 256),
        "w3": lin(k_lin[2], 64, 128),
        "w4": lin(k_lin[3], 32, 64),
        "w5": lin(k_lin[4], output_size, 32),
        "b5": jax.random.uniform(k_lin[5], (output_size,), jnp.float32, -0.1, 0.1),
    }
    # BatchNorm affine params + running statistics (inference mode).
    k_bn = jax.random.split(jax.random.fold_in(key, 1), 4)
    for i, (kb, feat) in enumerate(zip(k_bn, (256, 128, 64, 32)), start=1):
        kg, kbe, km, kv = jax.random.split(kb, 4)
        params[f"g{i}"] = 1.0 + 0.1 * jax.random.normal(kg, (feat,), jnp.float32)
        params[f"be{i}"] = 0.1 * jax.random.normal(kbe, (feat,), jnp.float32)
        params[f"m{i}"] = 0.05 * jax.random.normal(km, (feat,), jnp.float32)
        params[f"v{i}"] = jnp.abs(
            1.0 + 0.1 * jax.random.normal(kv, (feat,), jnp.float32))
    return params


def reference_forward(x, params):
    """Pure-JAX f32 reference mirroring the PyTorch forward (BN in eval mode)."""
    def bn(h, g, be, m, v):
        return g * (h - m) / jnp.sqrt(v + BN_EPS) + be

    h = x @ params["w1"].T
    h = jnp.maximum(bn(h, params["g1"], params["be1"], params["m1"], params["v1"]), 0.0)
    h = h @ params["w2"].T
    h = jnp.maximum(bn(h, params["g2"], params["be2"], params["m2"], params["v2"]), 0.0)
    h = h @ params["w3"].T
    h = jnp.maximum(bn(h, params["g3"], params["be3"], params["m3"], params["v3"]), 0.0)
    h = h @ params["w4"].T
    h = jnp.maximum(bn(h, params["g4"], params["be4"], params["m4"], params["v4"]), 0.0)
    return h @ params["w5"].T + params["b5"]


if __name__ == "__main__":
    key = jax.random.PRNGKey(0)
    k_param, k_x = jax.random.split(key)

    INPUT_SIZE = 32
    OUTPUT_SIZE = 8
    BATCH = 8

    params = init_params(k_param, INPUT_SIZE, OUTPUT_SIZE)
    x = jax.random.normal(k_x, (BATCH, INPUT_SIZE), jnp.float32)

    # One-time prep (BN fold + transpose + bf16 weight cast) — not in hot path.
    prepared = prepare_params(params)

    out = jax.block_until_ready(regression_net_forward(x, prepared))
    ref = jax.block_until_ready(reference_forward(x, params))

    assert out.shape == (BATCH, OUTPUT_SIZE)
    # bf16 MXU operands => relaxed tolerance vs the f32 reference.
    assert jnp.allclose(out, ref, atol=5e-2, rtol=5e-2), (
        f"mismatch vs reference, max abs err={float(jnp.max(jnp.abs(out - ref)))}")

    print("KERNEL_OK")
</pallas_src>

<mosaic_0001>
module attributes {stable_mosaic.version = 11 : i64} {
  func.func @_mlp_kernel(%arg0: i32, %arg1: memref<8x32xf32, #tpu.memory_space<vmem>>, %arg2: memref<32x256xbf16, #tpu.memory_space<vmem>>, %arg3: memref<1x256xf32, #tpu.memory_space<vmem>>, %arg4: memref<256x128xbf16, #tpu.memory_space<vmem>>, %arg5: memref<1x128xf32, #tpu.memory_space<vmem>>, %arg6: memref<128x64xbf16, #tpu.memory_space<vmem>>, %arg7: memref<1x64xf32, #tpu.memory_space<vmem>>, %arg8: memref<64x32xbf16, #tpu.memory_space<vmem>>, %arg9: memref<1x32xf32, #tpu.memory_space<vmem>>, %arg10: memref<32x8xbf16, #tpu.memory_space<vmem>>, %arg11: memref<1x8xf32, #tpu.memory_space<vmem>>, %arg12: memref<8x8xf32, #tpu.memory_space<vmem>>) attributes {dimension_semantics = [#tpu.dimension_semantics<parallel>], iteration_bounds = array<i64: 1>, scalar_prefetch = 0 : i64, scratch_operands = 0 : i64, tpu.core_type = #tpu.core_type<tc>, window_params = [{transform_indices = @transform_0, window_bounds = array<i64: 8, 32>}, {pipeline_mode = #tpu.pipeline_mode<synchronous>, transform_indices = @transform_1, window_bounds = array<i64: 32, 256>}, {pipeline_mode = #tpu.pipeline_mode<synchronous>, transform_indices = @transform_2, window_bounds = array<i64: 1, 256>}, {pipeline_mode = #tpu.pipeline_mode<synchronous>, transform_indices = @transform_3, window_bounds = array<i64: 256, 128>}, {pipeline_mode = #tpu.pipeline_mode<synchronous>, transform_indices = @transform_4, window_bounds = array<i64: 1, 128>}, {pipeline_mode = #tpu.pipeline_mode<synchronous>, transform_indices = @transform_5, window_bounds = array<i64: 128, 64>}, {pipeline_mode = #tpu.pipeline_mode<synchronous>, transform_indices = @transform_6, window_bounds = array<i64: 1, 64>}, {pipeline_mode = #tpu.pipeline_mode<synchronous>, transform_indices = @transform_7, window_bounds = array<i64: 64, 32>}, {pipeline_mode = #tpu.pipeline_mode<synchronous>, transform_indices = @transform_8, window_bounds = array<i64: 1, 32>}, {pipeline_mode = #tpu.pipeline_mode<synchronous>, transform_indices = @transform_9, window_bounds = array<i64: 32, 8>}, {pipeline_mode = #tpu.pipeline_mode<synchronous>, transform_indices = @transform_10, window_bounds = array<i64: 1, 8>}, {transform_indices = @transform_11, window_bounds = array<i64: 8, 8>}]} {
    %c0 = arith.constant 0 : index
    %c0_0 = arith.constant 0 : index
    %0 = vector.load %arg1[%c0, %c0_0] : memref<8x32xf32, #tpu.memory_space<vmem>>, vector<8x32xf32>
    %1 = arith.truncf %0 : vector<8x32xf32> to vector<8x32xbf16>
    %c0_1 = arith.constant 0 : index
    %c0_2 = arith.constant 0 : index
    %2 = vector.load %arg2[%c0_1, %c0_2] : memref<32x256xbf16, #tpu.memory_space<vmem>>, vector<32x256xbf16>
    %cst = arith.constant dense<0.000000e+00> : vector<8x256xf32>
    %3 = tpu.matmul %1, %2, %cst {dimension_numbers = #tpu.dot_dimension_numbers<[1], [0], [0], [1], [0, 0, 1, 1], [], []>} : vector<8x32xbf16>, vector<32x256xbf16>, vector<8x256xf32> -> vector<8x256xf32>
    %c0_3 = arith.constant 0 : index
    %c0_4 = arith.constant 0 : index
    %4 = vector.load %arg3[%c0_3, %c0_4] : memref<1x256xf32, #tpu.memory_space<vmem>>, vector<1x256xf32>
    %5 = vector.broadcast %4 : vector<1x256xf32> to vector<8x256xf32>
    %6 = arith.addf %3, %5 : vector<8x256xf32>
    %cst_5 = arith.constant 0.000000e+00 : f32
    %7 = vector.broadcast %cst_5 : f32 to vector<8x256xf32>
    %8 = arith.maximumf %6, %7 : vector<8x256xf32>
    %9 = arith.truncf %8 : vector<8x256xf32> to vector<8x256xbf16>
    %c0_6 = arith.constant 0 : index
    %c0_7 = arith.constant 0 : index
    %10 = vector.load %arg4[%c0_6, %c0_7] : memref<256x128xbf16, #tpu.memory_space<vmem>>, vector<256x128xbf16>
    %cst_8 = arith.constant dense<0.000000e+00> : vector<8x128xf32>
    %11 = tpu.matmul %9, %10, %cst_8 {dimension_numbers = #tpu.dot_dimension_numbers<[1], [0], [0], [1], [0, 0, 1, 1], [], []>} : vector<8x256xbf16>, vector<256x128xbf16>, vector<8x128xf32> -> vector<8x128xf32>
    %c0_9 = arith.constant 0 : index
    %c0_10 = arith.constant 0 : index
    %12 = vector.load %arg5[%c0_9, %c0_10] : memref<1x128xf32, #tpu.memory_space<vmem>>, vector<1x128xf32>
    %13 = vector.broadcast %12 : vector<1x128xf32> to vector<8x128xf32>
    %14 = arith.addf %11, %13 : vector<8x128xf32>
    %cst_11 = arith.constant 0.000000e+00 : f32
    %15 = vector.broadcast %cst_11 : f32 to vector<8x128xf32>
    %16 = arith.maximumf %14, %15 : vector<8x128xf32>
    %17 = arith.truncf %16 : vector<8x128xf32> to vector<8x128xbf16>
    %c0_12 = arith.constant 0 : index
    %c0_13 = arith.constant 0 : index
    %18 = vector.load %arg6[%c0_12, %c0_13] : memref<128x64xbf16, #tpu.memory_space<vmem>>, vector<128x64xbf16>
    %cst_14 = arith.constant dense<0.000000e+00> : vector<8x64xf32>
    %19 = tpu.matmul %17, %18, %cst_14 {dimension_numbers = #tpu.dot_dimension_numbers<[1], [0], [0], [1], [0, 0, 1, 1], [], []>} : vector<8x128xbf16>, vector<128x64xbf16>, vector<8x64xf32> -> vector<8x64xf32>
    %c0_15 = arith.constant 0 : index
    %c0_16 = arith.constant 0 : index
    %20 = vector.load %arg7[%c0_15, %c0_16] : memref<1x64xf32, #tpu.memory_space<vmem>>, vector<1x64xf32>
    %21 = vector.broadcast %20 : vector<1x64xf32> to vector<8x64xf32>
    %22 = arith.addf %19, %21 : vector<8x64xf32>
    %cst_17 = arith.constant 0.000000e+00 : f32
    %23 = vector.broadcast %cst_17 : f32 to vector<8x64xf32>
    %24 = arith.maximumf %22, %23 : vector<8x64xf32>
    %25 = arith.truncf %24 : vector<8x64xf32> to vector<8x64xbf16>
    %c0_18 = arith.constant 0 : index
    %c0_19 = arith.constant 0 : index
    %26 = vector.load %arg8[%c0_18, %c0_19] : memref<64x32xbf16, #tpu.memory_space<vmem>>, vector<64x32xbf16>
    %cst_20 = arith.constant dense<0.000000e+00> : vector<8x32xf32>
    %27 = tpu.matmul %25, %26, %cst_20 {dimension_numbers = #tpu.dot_dimension_numbers<[1], [0], [0], [1], [0, 0, 1, 1], [], []>} : vector<8x64xbf16>, vector<64x32xbf16>, vector<8x32xf32> -> vector<8x32xf32>
    %c0_21 = arith.constant 0 : index
    %c0_22 = arith.constant 0 : index
    %28 = vector.load %arg9[%c0_21, %c0_22] : memref<1x32xf32, #tpu.memory_space<vmem>>, vector<1x32xf32>
    %29 = vector.broadcast %28 : vector<1x32xf32> to vector<8x32xf32>
    %30 = arith.addf %27, %29 : vector<8x32xf32>
    %cst_23 = arith.constant 0.000000e+00 : f32
    %31 = vector.broadcast %cst_23 : f32 to vector<8x32xf32>
    %32 = arith.maximumf %30, %31 : vector<8x32xf32>
    %33 = arith.truncf %32 : vector<8x32xf32> to vector<8x32xbf16>
    %c0_24 = arith.constant 0 : index
    %c0_25 = arith.constant 0 : index
    %34 = vector.load %arg10[%c0_24, %c0_25] : memref<32x8xbf16, #tpu.memory_space<vmem>>, vector<32x8xbf16>
    %cst_26 = arith.constant dense<0.000000e+00> : vector<8x8xf32>
    %35 = tpu.matmul %33, %34, %cst_26 {dimension_numbers = #tpu.dot_dimension_numbers<[1], [0], [0], [1], [0, 0, 1, 1], [], []>} : vector<8x32xbf16>, vector<32x8xbf16>, vector<8x8xf32> -> vector<8x8xf32>
    %c0_27 = arith.constant 0 : index
    %c0_28 = arith.constant 0 : index
    %36 = vector.load %arg11[%c0_27, %c0_28] : memref<1x8xf32, #tpu.memory_space<vmem>>, vector<1x8xf32>
    %37 = vector.broadcast %36 : vector<1x8xf32> to vector<8x8xf32>
    %38 = arith.addf %35, %37 : vector<8x8xf32>
    %c0_29 = arith.constant 0 : index
    %c0_30 = arith.constant 0 : index
    %39 = vector.load %arg12[%c0_29, %c0_30] : memref<8x8xf32, #tpu.memory_space<vmem>>, vector<8x8xf32>
    tpu.vector_store %arg12[%c0_29, %c0_30], %38 {strides = array<i32>} : memref<8x8xf32, #tpu.memory_space<vmem>>, vector<8x8xf32>,
    return
  }
  func.func @transform_0(%arg0: i32) -> (i32, i32) {
    %c0_i32 = arith.constant 0 : i32
    %c0_i32_0 = arith.constant 0 : i32
    return %arg0, %c0_i32 : i32, i32
  }
  func.func @transform_1(%arg0: i32) -> (i32, i32) {
    %c0_i32 = arith.constant 0 : i32
    %c0_i32_0 = arith.constant 0 : i32
    %c0_i32_1 = arith.constant 0 : i32
    return %c0_i32, %c0_i32_0 : i32, i32
  }
  func.func @transform_2(%arg0: i32) -> (i32, i32) {
    %c0_i32 = arith.constant 0 : i32
    %c0_i32_0 = arith.constant 0 : i32
    %c0_i32_1 = arith.constant 0 : i32
    return %c0_i32, %c0_i32_0 : i32, i32
  }
  func.func @transform_3(%arg0: i32) -> (i32, i32) {
    %c0_i32 = arith.constant 0 : i32
    %c0_i32_0 = arith.constant 0 : i32
    %c0_i32_1 = arith.constant 0 : i32
    return %c0_i32, %c0_i32_0 : i32, i32
  }
  func.func @transform_4(%arg0: i32) -> (i32, i32) {
    %c0_i32 = arith.constant 0 : i32
    %c0_i32_0 = arith.constant 0 : i32
    %c0_i32_1 = arith.constant 0 : i32
    return %c0_i32, %c0_i32_0 : i32, i32
  }
  func.func @transform_5(%arg0: i32) -> (i32, i32) {
    %c0_i32 = arith.constant 0 : i32
    %c0_i32_0 = arith.constant 0 : i32
    %c0_i32_1 = arith.constant 0 : i32
    return %c0_i32, %c0_i32_0 : i32, i32
  }
  func.func @transform_6(%arg0: i32) -> (i32, i32) {
    %c0_i32 = arith.constant 0 : i32
    %c0_i32_0 = arith.constant 0 : i32
    %c0_i32_1 = arith.constant 0 : i32
    return %c0_i32, %c0_i32_0 : i32, i32
  }
  func.func @transform_7(%arg0: i32) -> (i32, i32) {
    %c0_i32 = arith.constant 0 : i32
    %c0_i32_0 = arith.constant 0 : i32
    %c0_i32_1 = arith.constant 0 : i32
    return %c0_i32, %c0_i32_0 : i32, i32
  }
  func.func @transform_8(%arg0: i32) -> (i32, i32) {
    %c0_i32 = arith.constant 0 : i32
    %c0_i32_0 = arith.constant 0 : i32
    %c0_i32_1 = arith.constant 0 : i32
    return %c0_i32, %c0_i32_0 : i32, i32
  }
  func.func @transform_9(%arg0: i32) -> (i32, i32) {
    %c0_i32 = arith.constant 0 : i32
    %c0_i32_0 = arith.constant 0 : i32
    %c0_i32_1 = arith.constant 0 : i32
    return %c0_i32, %c0_i32_0 : i32, i32
  }
  func.func @transform_10(%arg0: i32) -> (i32, i32) {
    %c0_i32 = arith.constant 0 : i32
    %c0_i32_0 = arith.constant 0 : i32
    %c0_i32_1 = arith.constant 0 : i32
    return %c0_i32, %c0_i32_0 : i32, i32
  }
  func.func @transform_11(%arg0: i32) -> (i32, i32) {
    %c0_i32 = arith.constant 0 : i32
    %c0_i32_0 = arith.constant 0 : i32
    return %arg0, %c0_i32 : i32, i32
  }
}

</mosaic_0001>

<llo_original>
// kernel: regression_net_forward.1
$region0: #{regression_net_forward.1}
  #allocation0 [shape = 'u32[]', space=smem, size = 0x4, offset = 0x4, fixed_abs, tag = 'smem constant byte address 0x4 - core index']
  #allocation1 [shape = 'u32[144,128]{1,0:T(1,128)}', space=vmem, size = 0x12000, scoped, tag = 'internal scratch']
  %s0 = inlined_call_operand.hbm [shape: f32[8,32], index: 0, kind: input, shape index: {}]
  %s1 = inlined_call_operand.hbm [shape: bf16[32,256], index: 1, kind: input, shape index: {}]
  %s2 = inlined_call_operand.vmem [shape: f32[1,256], index: 2, kind: input, shape index: {}]
  %s3 = inlined_call_operand.vmem [shape: bf16[256,128], index: 3, kind: input, shape index: {}]
  %s4 = inlined_call_operand.hbm [shape: f32[1,128], index: 4, kind: input, shape index: {}]
  %s5 = inlined_call_operand.vmem [shape: bf16[128,64], index: 5, kind: input, shape index: {}]
  %s6 = inlined_call_operand.hbm [shape: f32[1,64], index: 6, kind: input, shape index: {}]
  %s7 = inlined_call_operand.vmem [shape: bf16[64,32], index: 7, kind: input, shape index: {}]
  %s8 = inlined_call_operand.hbm [shape: f32[1,32], index: 8, kind: input, shape index: {}]
  %s9 = inlined_call_operand.vmem [shape: bf16[32,8], index: 9, kind: input, shape index: {}]
  %s10 = inlined_call_operand.hbm [shape: f32[1,8], index: 10, kind: input, shape index: {}]
  %s11 = inlined_call_operand.hbm [shape: f32[8,8], index: 11, kind: output, shape index: {}]
  %s12 = sld [smem:[#allocation0]]
  $region78: #{regression_net_forward.1} parent=0
    _
  %s14 = ssub.s32 1, %s12
  %s15 = scalar_select 0, %s14, %s12
  $region1: #{regression_net_forward.1} parent=0
    #allocation2 [shape = 'u8[4096]{0}', space=vmem, size = 0x1000, scoped, tag = 'input window, operand 0, single buffered']
    #allocation3 [shape = 's32[1]{0}', space=sflag, size = 0x4, scoped, tag = 'scoped memory for regression_net_forward.1']
    #allocation4 [shape = 's32[1]{0}', space=sflag, size = 0x4, scoped, tag = 'scoped memory for regression_net_forward.1']
    #allocation5 [shape = 'u8[16384]{0}', space=vmem, size = 0x4000, scoped, tag = 'input window, operand 1, single buffered']
    #allocation6 [shape = 's32[1]{0}', space=sflag, size = 0x4, scoped, tag = 'scoped memory for regression_net_forward.1']
    #allocation7 [shape = 'u8[512]{0}', space=vmem, size = 0x400, scoped, tag = 'input window, operand 4, single buffered']
    #allocation8 [shape = 'u8[512]{0}', space=vmem, size = 0x400, scoped, tag = 'input window, operand 6, single buffered']
    #allocation9 [shape = 's32[1]{0}', space=sflag, size = 0x4, scoped, tag = 'scoped memory for regression_net_forward.1']
    #allocation10 [shape = 'u8[512]{0}', space=vmem, size = 0x400, scoped, tag = 'input window, operand 8, single buffered']
    #allocation11 [shape = 'u8[512]{0}', space=vmem, size = 0x400, scoped, tag = 'input window, operand 10, single buffered']
    #allocation12 [shape = 's32[1]{0}', space=sflag, size = 0x4, scoped, tag = 'scoped memory for regression_net_forward.1']
    #allocation13 [shape = 'u8[4096]{0}', space=vmem, size = 0x1000, scoped, tag = 'output window, operand 0, single buffered']
    %16 = vsyncpa [#allocation3], 0
    %17 = vsyncpa [#allocation6], 0
    %18 = vsyncpa [#allocation9], 0
    %19 = vsyncpa [#allocation12], 0
    %20 = vsyncpa [#allocation4], 0
    // Predicated region
    $region2: #{regression_net_forward.1} parent=1 // pred_check
      _
    $region3: #{regression_net_forward.1} parent=1 // pred_check_branch
      %22 = sbr.rel (0) target = $region5
    $region4: #{regression_net_forward.1} parent=1 // pred_region
      %s24 = ssub.s32 128, 128
      %25 = vsyncadd [#allocation3], %s24
      %s27 = sshll.u32 [#allocation2], 4
      %s28 = int_to_ptr.vmem [resolvable:$true] %s27
      %30 = dma.hbm_to_vmem [thread:$0]  %s0, 128, %s28, [#allocation3]
    $region5: #{regression_net_forward.1} parent=1 // pred_fallthru
      _
    // Predicated region
    $region6: #{regression_net_forward.1} parent=1 // pred_check
      _
    $region7: #{regression_net_forward.1} parent=1 // pred_check_branch
      %32 = sbr.rel (0) target = $region9
    $region8: #{regression_net_forward.1} parent=1 // pred_region
      %s34 = ssub.s32 512, 512
      %35 = vsyncadd [#allocation6], %s34
      %s36 = sshll.u32 [#allocation5], 4
      %s37 = int_to_ptr.vmem [resolvable:$true] %s36
      %42 = dma.hbm_to_vmem [thread:$0]  %s1, 512, %s37, [#allocation6], 128, 128, 8
    $region9: #{regression_net_forward.1} parent=1 // pred_fallthru
      _
    // Predicated region
    $region10: #{regression_net_forward.1} parent=1 // pred_check
      _
    $region11: #{regression_net_forward.1} parent=1 // pred_check_branch
      %44 = sbr.rel (0) target = $region13
    $region12: #{regression_net_forward.1} parent=1 // pred_region
      _
    $region13: #{regression_net_forward.1} parent=1 // pred_fallthru
      _
    // Predicated region
    $region14: #{regression_net_forward.1} parent=1 // pred_check
      _
    $region15: #{regression_net_forward.1} parent=1 // pred_check_branch
      %46 = sbr.rel (0) target = $region17
    $region16: #{regression_net_forward.1} parent=1 // pred_region
      _
    $region17: #{regression_net_forward.1} parent=1 // pred_fallthru
      _
    // Predicated region
    $region18: #{regression_net_forward.1} parent=1 // pred_check
      _
    $region19: #{regression_net_forward.1} parent=1 // pred_check_branch
      %48 = sbr.rel (0) target = $region21
    $region20: #{regression_net_forward.1} parent=1 // pred_region
      %s50 = ssub.s32 16, 16
      %51 = vsyncadd [#allocation6], %s50
      %s53 = sshll.u32 [#allocation7], 4
      %s54 = int_to_ptr.vmem [resolvable:$true] %s53
      %56 = dma.hbm_to_vmem [thread:$0]  %s4, 16, %s54, [#allocation6]
    $region21: #{regression_net_forward.1} parent=1 // pred_fallthru
      _
    // Predicated region
    $region22: #{regression_net_forward.1} parent=1 // pred_check
      _
    $region23: #{regression_net_forward.1} parent=1 // pred_check_branch
      %58 = sbr.rel (0) target = $region25
    $region24: #{regression_net_forward.1} parent=1 // pred_region
      _
    $region25: #{regression_net_forward.1} parent=1 // pred_fallthru
      _
    // Predicated region
    $region26: #{regression_net_forward.1} parent=1 // pred_check
      _
    $region27: #{regression_net_forward.1} parent=1 // pred_check_branch
      %60 = sbr.rel (0) target = $region29
    $region28: #{regression_net_forward.1} parent=1 // pred_region
      %s62 = ssub.s32 16, 16
      %63 = vsyncadd [#allocation9], %s62
      %s65 = sshll.u32 [#allocation8], 4
      %s66 = int_to_ptr.vmem [resolvable:$true] %s65
      %68 = dma.hbm_to_vmem [thread:$0]  %s6, 16, %s66, [#allocation9]
    $region29: #{regression_net_forward.1} parent=1 // pred_fallthru
      _
    // Predicated region
    $region30: #{regression_net_forward.1} parent=1 // pred_check
      _
    $region31: #{regression_net_forward.1} parent=1 // pred_check_branch
      %70 = sbr.rel (0) target = $region33
    $region32: #{regression_net_forward.1} parent=1 // pred_region
      _
    $region33: #{regression_net_forward.1} parent=1 // pred_fallthru
      _
    // Predicated region
    $region34: #{regression_net_forward.1} parent=1 // pred_check
      _
    $region35: #{regression_net_forward.1} parent=1 // pred_check_branch
      %72 = sbr.rel (0) target = $region37
    $region36: #{regression_net_forward.1} parent=1 // pred_region
      %s74 = ssub.s32 16, 16
      %75 = vsyncadd [#allocation9], %s74
      %s77 = sshll.u32 [#allocation10], 4
      %s78 = int_to_ptr.vmem [resolvable:$true] %s77
      %80 = dma.hbm_to_vmem [thread:$0]  %s8, 16, %s78, [#allocation9]
    $region37: #{regression_net_forward.1} parent=1 // pred_fallthru
      _
    // Predicated region
    $region38: #{regression_net_forward.1} parent=1 // pred_check
      _
    $region39: #{regression_net_forward.1} parent=1 // pred_check_branch
      %82 = sbr.rel (0) target = $region41
    $region40: #{regression_net_forward.1} parent=1 // pred_region
      _
    $region41: #{regression_net_forward.1} parent=1 // pred_fallthru
      _
    // Predicated region
    $region42: #{regression_net_forward.1} parent=1 // pred_check
      _
    $region43: #{regression_net_forward.1} parent=1 // pred_check_branch
      %84 = sbr.rel (0) target = $region45
    $region44: #{regression_net_forward.1} parent=1 // pred_region
      %s86 = ssub.s32 16, 16
      %87 = vsyncadd [#allocation12], %s86
      %s89 = sshll.u32 [#allocation11], 4
      %s90 = int_to_ptr.vmem [resolvable:$true] %s89
      %92 = dma.hbm_to_vmem [thread:$0]  %s10, 16, %s90, [#allocation12]
    $region45: #{regression_net_forward.1} parent=1 // pred_fallthru
      _
    // Predicated region
    $region46: #{regression_net_forward.1} parent=1 // pred_check
      _
    $region47: #{regression_net_forward.1} parent=1 // pred_check_branch
      %94 = sbr.rel (0) target = $region49
    $region48: #{regression_net_forward.1} parent=1 // pred_region
      %95 = dma.done [#allocation3], 128
    $region49: #{regression_net_forward.1} parent=1 // pred_fallthru
      _
    // Predicated region
    $region50: #{regression_net_forward.1} parent=1 // pred_check
      _
    $region51: #{regression_net_forward.1} parent=1 // pred_check_branch
      %97 = sbr.rel (0) target = $region53
    $region52: #{regression_net_forward.1} parent=1 // pred_region
      %98 = dma.done [#allocation6], 512
    $region53: #{regression_net_forward.1} parent=1 // pred_fallthru
      _
    // Predicated region
    $region54: #{regression_net_forward.1} parent=1 // pred_check
      _
    $region55: #{regression_net_forward.1} parent=1 // pred_check_branch
      %100 = sbr.rel (0) target = $region57
    $region56: #{regression_net_forward.1} parent=1 // pred_region
      %101 = dma.done [#allocation6], 16
    $region57: #{regression_net_forward.1} parent=1 // pred_fallthru
      _
    // Predicated region
    $region58: #{regression_net_forward.1} parent=1 // pred_check
      _
    $region59: #{regression_net_forward.1} parent=1 // pred_check_branch
      %103 = sbr.rel (0) target = $region61
    $region60: #{regression_net_forward.1} parent=1 // pred_region
      %104 = dma.done [#allocation9], 16
    $region61: #{regression_net_forward.1} parent=1 // pred_fallthru
      _
    // Predicated region
    $region62: #{regression_net_forward.1} parent=1 // pred_check
      _
    $region63: #{regression_net_forward.1} parent=1 // pred_check_branch
      %106 = sbr.rel (0) target = $region65
    $region64: #{regression_net_forward.1} parent=1 // pred_region
      %107 = dma.done [#allocation9], 16
    $region65: #{regression_net_forward.1} parent=1 // pred_fallthru
      _
    // Predicated region
    $region66: #{regression_net_forward.1} parent=1 // pred_check
      _
    $region67: #{regression_net_forward.1} parent=1 // pred_check_branch
      %109 = sbr.rel (0) target = $region69
    $region68: #{regression_net_forward.1} parent=1 // pred_region
      %110 = dma.done [#allocation12], 16
    $region69: #{regression_net_forward.1} parent=1 // pred_fallthru
      _
    %v112 = vld [vmem:[#allocation2] sm:$0xff]
    %v113 = vpack.c.bf16 %v112, %v112
    %v114 = vld [vmem:[#allocation5] sm:$0xff]
    %v115 = vld [vmem:[#allocation5 + $0x8] sm:$0xff]
    %v116 = vld [vmem:[#allocation5 + $0x10] sm:$0xff]
    %v117 = vld [vmem:[#allocation5 + $0x18] sm:$0xff]
    %v118 = vld [vmem:[%s2] sm:$0x3]
    %v120 = vlaneseq
    %v121 = vshrl.u32 %v120, 7
    %v122 = vsub.s32 0, %v121
    %v123 = vrot.slane %v118, %v122
    %v124 = vlaneseq
    %v125 = vshrl.u32 %v124, 7
    %v126 = vsub.s32 1, %v125
    %v127 = vrot.slane %v118, %v126
    %v134 = vunpack.c.l.b16 %v114
    %v135 = vunpack.c.h.b16 %v114
    %v136 = vunpack.c.l.b16 %v115
    %v137 = vunpack.c.h.b16 %v115
    %v138 = vunpack.c.l.b16 %v116
    %v139 = vunpack.c.h.b16 %v116
    %v140 = vunpack.c.l.b16 %v117
    %v141 = vunpack.c.h.b16 %v117
    %v142 = vpack.c.b16 %v136, %v134
    %v143 = vpack.c.b16 %v137, %v135
    %v144 = vpack.c.b16 %v140, %v138
    %v145 = vpack.c.b16 %v141, %v139
    %vm150 = vcmask 261120
    %v152 = vsel %vm150, %v113, 0
    %154 = vmatprep.subr.bf16.mxu0 0
    %155 = vmatpush1.bf16.msra.mxu0 0
    %156 = vmatprep.subr.bf16.mxu0 0
    %157 = vmatpush1.bf16.msra.mxu0 0
    %158 = vmatprep.subr.bf16.mxu0 0
    %159 = vmatpush1.bf16.msra.mxu0 0
    %160 = vmatprep.subr.bf16.mxu0 0
    %161 = vmatpush1.bf16.msra.mxu0 0
    %162 = vmatprep.subr.bf16.mxu0 0
    %163 = vmatpush1.bf16.msra.mxu0 0
    %164 = vmatprep.subr.bf16.mxu0 0
    %165 = vmatpush1.bf16.msra.mxu0 0
    %166 = vmatprep.subr.bf16.mxu0 %v145
    %167 = vmatpush1.bf16.msra.mxu0 %v144
    %168 = vmatprep.subr.bf16.mxu0 %v143
    %169 = vmatpush1.bf16.msra.mxu0 %v142
    %170 = vmatprep.subr.bf16.mxu0 0
    %171 = vmatpush2.bf16.msra.mxu0 0
    %172 = vmatprep.subr.bf16.mxu0 0
    %173 = vmatpush2.bf16.msra.mxu0 0
    %174 = vmatprep.subr.bf16.mxu0 0
    %175 = vmatpush2.bf16.msra.mxu0 0
    %176 = vmatprep.subr.bf16.mxu0 0
    %177 = vmatpush2.bf16.msra.mxu0 0
    %178 = vmatprep.subr.bf16.mxu0 0
    %179 = vmatpush2.bf16.msra.mxu0 0
    %180 = vmatprep.subr.bf16.mxu0 0
    %181 = vmatpush2.bf16.msra.mxu0 0
    %182 = vmatprep.subr.bf16.mxu0 0
    %183 = vmatpush2.bf16.msra.mxu0 0
    %184 = vmatprep.subr.bf16.mxu0 0
    %185 = vmatpush2.bf16.msra.mxu0 0
    %186 = vmatprep.mubr.bf16.mxu0 0
    %187 = vmatmul.mubr.bf16.gmra.mxu0 %v152
    %v188 = vpop.f32.mrf.mxu0
    %v189 = vadd.f32 %v123, %v188
    %v190 = vpop.f32.mrf.mxu0
    %v191 = vadd.f32 %v127, %v190
    %v192 = vpop.f32.mrf.mxu0
    %v193 = vpop.f32.mrf.mxu0
    %194 = vdwg.mxu0
    %v195 = vmax.f32 %v189, 0.0
    %v196 = vmax.f32 %v191, 0.0
    %v197 = vpack.c.bf16 %v195, %v195
    %v198 = vpack.c.bf16 %v196, %v196
    %v199 = vld [vmem:[%s3] sm:$0xf]
    %v200 = vld [vmem:[%s3 + $0x4] sm:$0xf]
    %v201 = vld [vmem:[%s3 + $0x8] sm:$0xf]
    %v202 = vld [vmem:[%s3 + $0xc] sm:$0xf]
    %v203 = vld [vmem:[%s3 + $0x10] sm:$0xf]
    %v204 = vld [vmem:[%s3 + $0x14] sm:$0xf]
    %v205 = vld [vmem:[%s3 + $0x18] sm:$0xf]
    %v206 = vld [vmem:[%s3 + $0x1c] sm:$0xf]
    %v207 = vld [vmem:[%s3 + $0x20] sm:$0xf]
    %v208 = vld [vmem:[%s3 + $0x24] sm:$0xf]
    %v209 = vld [vmem:[%s3 + $0x28] sm:$0xf]
    %v210 = vld [vmem:[%s3 + $0x2c] sm:$0xf]
    %v211 = vld [vmem:[%s3 + $0x30] sm:$0xf]
    %v212 = vld [vmem:[%s3 + $0x34] sm:$0xf]
    %v213 = vld [vmem:[%s3 + $0x38] sm:$0xf]
    %v214 = vld [vmem:[%s3 + $0x3c] sm:$0xf]
    %v215 = vld [vmem:[%s3 + $0x40] sm:$0xf]
    %v216 = vld [vmem:[%s3 + $0x44] sm:$0xf]
    %v217 = vld [vmem:[%s3 + $0x48] sm:$0xf]
    %v218 = vld [vmem:[%s3 + $0x4c] sm:$0xf]
    %v219 = vld [vmem:[%s3 + $0x50] sm:$0xf]
    %v220 = vld [vmem:[%s3 + $0x54] sm:$0xf]
    %v221 = vld [vmem:[%s3 + $0x58] sm:$0xf]
    %v222 = vld [vmem:[%s3 + $0x5c] sm:$0xf]
    %v223 = vld [vmem:[%s3 + $0x60] sm:$0xf]
    %v224 = vld [vmem:[%s3 + $0x64] sm:$0xf]
    %v225 = vld [vmem:[%s3 + $0x68] sm:$0xf]
    %v226 = vld [vmem:[%s3 + $0x6c] sm:$0xf]
    %v227 = vld [vmem:[%s3 + $0x70] sm:$0xf]
    %v228 = vld [vmem:[%s3 + $0x74] sm:$0xf]
    %v229 = vld [vmem:[%s3 + $0x78] sm:$0xf]
    %v230 = vld [vmem:[%s3 + $0x7c] sm:$0xf]
    %v231 = vld [vmem:[#allocation7] sm:$0x1]
    %v233 = vlaneseq
    %v234 = vshrl.u32 %v233, 7
    %v235 = vsub.s32 0, %v234
    %v236 = vrot.slane %v231, %v235
    %v270 = vunpack.c.l.b16 %v199
    %v271 = vunpack.c.l.b16 %v200
    %v272 = vunpack.c.l.b16 %v201
    %v273 = vunpack.c.l.b16 %v202
    %v274 = vunpack.c.l.b16 %v203
    %v275 = vunpack.c.l.b16 %v204
    %v276 = vunpack.c.l.b16 %v205
    %v277 = vunpack.c.l.b16 %v206
    %v278 = vunpack.c.l.b16 %v207
    %v279 = vunpack.c.l.b16 %v208
    %v280 = vunpack.c.l.b16 %v209
    %v281 = vunpack.c.l.b16 %v210
    %v282 = vunpack.c.l.b16 %v211
    %v283 = vunpack.c.l.b16 %v212
    %v284 = vunpack.c.l.b16 %v213
    %v285 = vunpack.c.l.b16 %v214
    %v286 = vunpack.c.l.b16 %v215
    %v287 = vunpack.c.l.b16 %v216
    %v288 = vunpack.c.l.b16 %v217
    %v289 = vunpack.c.l.b16 %v218
    %v290 = vunpack.c.l.b16 %v219
    %v291 = vunpack.c.l.b16 %v220
    %v292 = vunpack.c.l.b16 %v221
    %v293 = vunpack.c.l.b16 %v222
    %v294 = vunpack.c.l.b16 %v223
    %v295 = vunpack.c.l.b16 %v224
    %v296 = vunpack.c.l.b16 %v225
    %v297 = vunpack.c.l.b16 %v226
    %v298 = vunpack.c.l.b16 %v227
    %v299 = vunpack.c.l.b16 %v228
    %v300 = vunpack.c.l.b16 %v229
    %v301 = vunpack.c.l.b16 %v230
    %v302 = vpack.c.b16 %v271, %v270
    %v303 = vpack.c.b16 %v273, %v272
    %v304 = vpack.c.b16 %v275, %v274
    %v305 = vpack.c.b16 %v277, %v276
    %v306 = vpack.c.b16 %v279, %v278
    %v307 = vpack.c.b16 %v281, %v280
    %v308 = vpack.c.b16 %v283, %v282
    %v309 = vpack.c.b16 %v285, %v284
    %v310 = vpack.c.b16 %v287, %v286
    %v311 = vpack.c.b16 %v289, %v288
    %v312 = vpack.c.b16 %v291, %v290
    %v313 = vpack.c.b16 %v293, %v292
    %v314 = vpack.c.b16 %v295, %v294
    %v315 = vpack.c.b16 %v297, %v296
    %v316 = vpack.c.b16 %v299, %v298
    %v317 = vpack.c.b16 %v301, %v300
    %334 = vmatprep.subr.bf16.mxu0 0
    %335 = vmatpush1.bf16.msra.mxu0 %v309
    %336 = vmatprep.subr.bf16.mxu0 0
    %337 = vmatpush1.bf16.msra.mxu0 %v308
    %338 = vmatprep.subr.bf16.mxu0 0
    %339 = vmatpush1.bf16.msra.mxu0 %v307
    %340 = vmatprep.subr.bf16.mxu0 0
    %341 = vmatpush1.bf16.msra.mxu0 %v306
    %342 = vmatprep.subr.bf16.mxu0 0
    %343 = vmatpush1.bf16.msra.mxu0 %v305
    %344 = vmatprep.subr.bf16.mxu0 0
    %345 = vmatpush1.bf16.msra.mxu0 %v304
    %346 = vmatprep.subr.bf16.mxu0 0
    %347 = vmatpush1.bf16.msra.mxu0 %v303
    %348 = vmatprep.subr.bf16.mxu0 0
    %349 = vmatpush1.bf16.msra.mxu0 %v302
    %350 = vmatprep.subr.bf16.mxu0 0
    %351 = vmatpush2.bf16.msra.mxu0 %v317
    %352 = vmatprep.subr.bf16.mxu0 0
    %353 = vmatpush2.bf16.msra.mxu0 %v316
    %354 = vmatprep.subr.bf16.mxu0 0
    %355 = vmatpush2.bf16.msra.mxu0 %v315
    %356 = vmatprep.subr.bf16.mxu0 0
    %357 = vmatpush2.bf16.msra.mxu0 %v314
    %358 = vmatprep.subr.bf16.mxu0 0
    %359 = vmatpush2.bf16.msra.mxu0 %v313
    %360 = vmatprep.subr.bf16.mxu0 0
    %361 = vmatpush2.bf16.msra.mxu0 %v312
    %362 = vmatprep.subr.bf16.mxu0 0
    %363 = vmatpush2.bf16.msra.mxu0 %v311
    %364 = vmatprep.subr.bf16.mxu0 0
    %365 = vmatpush2.bf16.msra.mxu0 %v310
    %366 = vmatprep.mubr.bf16.mxu0 %v198
    %367 = vmatmul.mubr.bf16.gmra.mxu0 %v197
    %v368 = vpop.f32.mrf.mxu0
    %v369 = vadd.f32 %v236, %v368
    %v370 = vpop.f32.mrf.mxu0
    %v371 = vpop.f32.mrf.mxu0
    %v372 = vpop.f32.mrf.mxu0
    %373 = vdwg.mxu0
    %v374 = vmax.f32 %v369, 0.0
    %v375 = vpack.c.bf16 %v374, %v374
    %v376 = vld [vmem:[%s5] sm:$0xf]
    %v377 = vld [vmem:[%s5 + $0x4] sm:$0xf]
    %v378 = vld [vmem:[%s5 + $0x8] sm:$0xf]
    %v379 = vld [vmem:[%s5 + $0xc] sm:$0xf]
    %v380 = vld [vmem:[%s5 + $0x10] sm:$0xf]
    %v381 = vld [vmem:[%s5 + $0x14] sm:$0xf]
    %v382 = vld [vmem:[%s5 + $0x18] sm:$0xf]
    %v383 = vld [vmem:[%s5 + $0x1c] sm:$0xf]
    %v384 = vld [vmem:[%s5 + $0x20] sm:$0xf]
    %v385 = vld [vmem:[%s5 + $0x24] sm:$0xf]
    %v386 = vld [vmem:[%s5 + $0x28] sm:$0xf]
    %v387 = vld [vmem:[%s5 + $0x2c] sm:$0xf]
    %v388 = vld [vmem:[%s5 + $0x30] sm:$0xf]
    %v389 = vld [vmem:[%s5 + $0x34] sm:$0xf]
    %v390 = vld [vmem:[%s5 + $0x38] sm:$0xf]
    %v391 = vld [vmem:[%s5 + $0x3c] sm:$0xf]
    %v392 = vld [vmem:[#allocation8] sm:$0x1]
    %v394 = vlaneseq
    %v395 = vshrl.u32 %v394, 7
    %v396 = vsub.s32 0, %v395
    %v397 = vrot.slane %v392, %v396
    %v415 = vunpack.c.l.b16 %v376
    %v416 = vunpack.c.l.b16 %v377
    %v417 = vunpack.c.l.b16 %v378
    %v418 = vunpack.c.l.b16 %v379
    %v419 = vunpack.c.l.b16 %v380
    %v420 = vunpack.c.l.b16 %v381
    %v421 = vunpack.c.l.b16 %v382
    %v422 = vunpack.c.l.b16 %v383
    %v423 = vunpack.c.l.b16 %v384
    %v424 = vunpack.c.l.b16 %v385
    %v425 = vunpack.c.l.b16 %v386
    %v426 = vunpack.c.l.b16 %v387
    %v427 = vunpack.c.l.b16 %v388
    %v428 = vunpack.c.l.b16 %v389
    %v429 = vunpack.c.l.b16 %v390
    %v430 = vunpack.c.l.b16 %v391
    %v431 = vpack.c.b16 %v416, %v415
    %v432 = vpack.c.b16 %v418, %v417
    %v433 = vpack.c.b16 %v420, %v419
    %v434 = vpack.c.b16 %v422, %v421
    %v435 = vpack.c.b16 %v424, %v423
    %v436 = vpack.c.b16 %v426, %v425
    %v437 = vpack.c.b16 %v428, %v427
    %v438 = vpack.c.b16 %v430, %v429
    %447 = vmatprep.subr.bf16.mxu0 0
    %448 = vmatpush1.bf16.msra.mxu0 %v438
    %449 = vmatprep.subr.bf16.mxu0 0
    %450 = vmatpush1.bf16.msra.mxu0 %v437
    %451 = vmatprep.subr.bf16.mxu0 0
    %452 = vmatpush1.bf16.msra.mxu0 %v436
    %453 = vmatprep.subr.bf16.mxu0 0
    %454 = vmatpush1.bf16.msra.mxu0 %v435
    %455 = vmatprep.subr.bf16.mxu0 0
    %456 = vmatpush1.bf16.msra.mxu0 %v434
    %457 = vmatprep.subr.bf16.mxu0 0
    %458 = vmatpush1.bf16.msra.mxu0 %v433
    %459 = vmatprep.subr.bf16.mxu0 0
    %460 = vmatpush1.bf16.msra.mxu0 %v432
    %461 = vmatprep.subr.bf16.mxu0 0
    %462 = vmatpush1.bf16.msra.mxu0 %v431
    %463 = vmatprep.subr.bf16.mxu0 0
    %464 = vmatpush2.bf16.msra.mxu0 0
    %465 = vmatprep.subr.bf16.mxu0 0
    %466 = vmatpush2.bf16.msra.mxu0 0
    %467 = vmatprep.subr.bf16.mxu0 0
    %468 = vmatpush2.bf16.msra.mxu0 0
    %469 = vmatprep.subr.bf16.mxu0 0
    %470 = vmatpush2.bf16.msra.mxu0 0
    %471 = vmatprep.subr.bf16.mxu0 0
    %472 = vmatpush2.bf16.msra.mxu0 0
    %473 = vmatprep.subr.bf16.mxu0 0
    %474 = vmatpush2.bf16.msra.mxu0 0
    %475 = vmatprep.subr.bf16.mxu0 0
    %476 = vmatpush2.bf16.msra.mxu0 0
    %477 = vmatprep.subr.bf16.mxu0 0
    %478 = vmatpush2.bf16.msra.mxu0 0
    %479 = vmatprep.mubr.bf16.mxu0 0
    %480 = vmatmul.mubr.bf16.gmra.mxu0 %v375
    %v481 = vpop.f32.mrf.mxu0
    %v482 = vadd.f32 %v397, %v481
    %v483 = vpop.f32.mrf.mxu0
    %v484 = vpop.f32.mrf.mxu0
    %v485 = vpop.f32.mrf.mxu0
    %486 = vdwg.mxu0
    %v487 = vmax.f32 %v482, 0.0
    %v488 = vpack.c.bf16 %v487, %v487
    %v489 = vld [vmem:[%s7] sm:$0xf]
    %v490 = vld [vmem:[%s7 + $0x4] sm:$0xf]
    %v491 = vld [vmem:[%s7 + $0x8] sm:$0xf]
    %v492 = vld [vmem:[%s7 + $0xc] sm:$0xf]
    %v493 = vld [vmem:[%s7 + $0x10] sm:$0xf]
    %v494 = vld [vmem:[%s7 + $0x14] sm:$0xf]
    %v495 = vld [vmem:[%s7 + $0x18] sm:$0xf]
    %v496 = vld [vmem:[%s7 + $0x1c] sm:$0xf]
    %v497 = vld [vmem:[#allocation10] sm:$0x1]
    %v499 = vlaneseq
    %v500 = vshrl.u32 %v499, 7
    %v501 = vsub.s32 0, %v500
    %v502 = vrot.slane %v497, %v501
    %v512 = vunpack.c.l.b16 %v489
    %v513 = vunpack.c.l.b16 %v490
    %v514 = vunpack.c.l.b16 %v491
    %v515 = vunpack.c.l.b16 %v492
    %v516 = vunpack.c.l.b16 %v493
    %v517 = vunpack.c.l.b16 %v494
    %v518 = vunpack.c.l.b16 %v495
    %v519 = vunpack.c.l.b16 %v496
    %v520 = vpack.c.b16 %v513, %v512
    %v521 = vpack.c.b16 %v515, %v514
    %v522 = vpack.c.b16 %v517, %v516
    %v523 = vpack.c.b16 %v519, %v518
    %vm528 = vcmask 523264
    %v530 = vsel %vm528, %v488, 0
    %532 = vmatprep.subr.bf16.mxu0 0
    %533 = vmatpush1.bf16.msra.mxu0 0
    %534 = vmatprep.subr.bf16.mxu0 0
    %535 = vmatpush1.bf16.msra.mxu0 0
    %536 = vmatprep.subr.bf16.mxu0 0
    %537 = vmatpush1.bf16.msra.mxu0 0
    %538 = vmatprep.subr.bf16.mxu0 0
    %539 = vmatpush1.bf16.msra.mxu0 0
    %540 = vmatprep.subr.bf16.mxu0 0
    %541 = vmatpush1.bf16.msra.mxu0 %v523
    %542 = vmatprep.subr.bf16.mxu0 0
    %543 = vmatpush1.bf16.msra.mxu0 %v522
    %544 = vmatprep.subr.bf16.mxu0 0
    %545 = vmatpush1.bf16.msra.mxu0 %v521
    %546 = vmatprep.subr.bf16.mxu0 0
    %547 = vmatpush1.bf16.msra.mxu0 %v520
    %548 = vmatprep.subr.bf16.mxu0 0
    %549 = vmatpush2.bf16.msra.mxu0 0
    %550 = vmatprep.subr.bf16.mxu0 0
    %551 = vmatpush2.bf16.msra.mxu0 0
    %552 = vmatprep.subr.bf16.mxu0 0
    %553 = vmatpush2.bf16.msra.mxu0 0
    %554 = vmatprep.subr.bf16.mxu0 0
    %555 = vmatpush2.bf16.msra.mxu0 0
    %556 = vmatprep.subr.bf16.mxu0 0
    %557 = vmatpush2.bf16.msra.mxu0 0
    %558 = vmatprep.subr.bf16.mxu0 0
    %559 = vmatpush2.bf16.msra.mxu0 0
    %560 = vmatprep.subr.bf16.mxu0 0
    %561 = vmatpush2.bf16.msra.mxu0 0
    %562 = vmatprep.subr.bf16.mxu0 0
    %563 = vmatpush2.bf16.msra.mxu0 0
    %564 = vmatprep.mubr.bf16.mxu0 0
    %565 = vmatmul.mubr.bf16.gmra.mxu0 %v530
    %v566 = vpop.f32.mrf.mxu0
    %v567 = vadd.f32 %v502, %v566
    %v568 = vpop.f32.mrf.mxu0
    %v569 = vpop.f32.mrf.mxu0
    %v570 = vpop.f32.mrf.mxu0
    %571 = vdwg.mxu0
    %v572 = vmax.f32 %v567, 0.0
    %v573 = vpack.c.bf16 %v572, %v572
    %v574 = vld [vmem:[%s9] sm:$0xf]
    %v575 = vld [vmem:[%s9 + $0x4] sm:$0xf]
    %v576 = vld [vmem:[%s9 + $0x8] sm:$0xf]
    %v577 = vld [vmem:[%s9 + $0xc] sm:$0xf]
    %v578 = vld [vmem:[#allocation11] sm:$0x1]
    %v580 = vlaneseq
    %v581 = vshrl.u32 %v580, 7
    %v582 = vsub.s32 0, %v581
    %v583 = vrot.slane %v578, %v582
    %v589 = vunpack.c.l.b16 %v574
    %v590 = vunpack.c.l.b16 %v575
    %v591 = vunpack.c.l.b16 %v576
    %v592 = vunpack.c.l.b16 %v577
    %v593 = vpack.c.b16 %v590, %v589
    %v594 = vpack.c.b16 %v592, %v591
    %v598 = vsel %vm150, %v573, 0
    %600 = vmatprep.subr.bf16.mxu0 0
    %601 = vmatpush1.bf16.msra.mxu0 0
    %602 = vmatprep.subr.bf16.mxu0 0
    %603 = vmatpush1.bf16.msra.mxu0 0
    %604 = vmatprep.subr.bf16.mxu0 0
    %605 = vmatpush1.bf16.msra.mxu0 0
    %606 = vmatprep.subr.bf16.mxu0 0
    %607 = vmatpush1.bf16.msra.mxu0 0
    %608 = vmatprep.subr.bf16.mxu0 0
    %609 = vmatpush1.bf16.msra.mxu0 0
    %610 = vmatprep.subr.bf16.mxu0 0
    %611 = vmatpush1.bf16.msra.mxu0 0
    %612 = vmatprep.subr.bf16.mxu0 0
    %613 = vmatpush1.bf16.msra.mxu0 %v594
    %614 = vmatprep.subr.bf16.mxu0 0
    %615 = vmatpush1.bf16.msra.mxu0 %v593
    %616 = vmatprep.subr.bf16.mxu0 0
    %617 = vmatpush2.bf16.msra.mxu0 0
    %618 = vmatprep.subr.bf16.mxu0 0
    %619 = vmatpush2.bf16.msra.mxu0 0
    %620 = vmatprep.subr.bf16.mxu0 0
    %621 = vmatpush2.bf16.msra.mxu0 0
    %622 = vmatprep.subr.bf16.mxu0 0
    %623 = vmatpush2.bf16.msra.mxu0 0
    %624 = vmatprep.subr.bf16.mxu0 0
    %625 = vmatpush2.bf16.msra.mxu0 0
    %626 = vmatprep.subr.bf16.mxu0 0
    %627 = vmatpush2.bf16.msra.mxu0 0
    %628 = vmatprep.subr.bf16.mxu0 0
    %629 = vmatpush2.bf16.msra.mxu0 0
    %630 = vmatprep.subr.bf16.mxu0 0
    %631 = vmatpush2.bf16.msra.mxu0 0
    %632 = vmatprep.mubr.bf16.mxu0 0
    %633 = vmatmul.mubr.bf16.gmra.mxu0 %v598
    %v634 = vpop.f32.mrf.mxu0
    %v635 = vadd.f32 %v583, %v634
    %v636 = vpop.f32.mrf.mxu0
    %v637 = vpop.f32.mrf.mxu0
    %v638 = vpop.f32.mrf.mxu0
    %639 = vdwg.mxu0
    %vm640 = vcmask 64512
    %641 = vst.msk [vmem:[#allocation13] sm:$0xff] %vm640, %v635
    // Predicated region
    $region70: #{regression_net_forward.1} parent=1 // pred_check
      _
    $region71: #{regression_net_forward.1} parent=1 // pred_check_branch
      %643 = sbr.rel (0) target = $region73
    $region72: #{regression_net_forward.1} parent=1 // pred_region
      %s645 = ssub.s32 128, 128
      %646 = vsyncadd [#allocation4], %s645
      %s648 = sshll.u32 [#allocation13], 4
      %s649 = int_to_ptr.vmem [resolvable:$true] %s648
      %651 = dma.vmem_to_hbm [thread:$0]  %s649, 128, %s11, [#allocation4]
    $region73: #{regression_net_forward.1} parent=1 // pred_fallthru
      _
    // Predicated region
    $region74: #{regression_net_forward.1} parent=1 // pred_check
      _
    $region75: #{regression_net_forward.1} parent=1 // pred_check_branch
      %653 = sbr.rel (0) target = $region77
    $region76: #{regression_net_forward.1} parent=1 // pred_region
      %654 = dma.done [#allocation4], 128
    $region77: #{regression_net_forward.1} parent=1 // pred_fallthru
      _
    %655 = vsyncpa [#allocation3], 1
    %656 = vsyncpa [#allocation6], 1
    %657 = vsyncpa [#allocation9], 1
    %658 = vsyncpa [#allocation12], 1
    %659 = vsyncpa [#allocation4], 1

</llo_original>
